<compile_context>
chip_gen: v6e
topology: v6e:2x2x1
jax: 0.10.0
libtpu: 0.0.40
codegen_flags: <defaults>
</compile_context>

<pallas_src>
import functools

import jax
import jax.numpy as jnp
from jax.experimental import pallas as pl
from jax.experimental.pallas import tpu as pltpu


def _legacy_xor_kernel(xT_ref, w1_ref, b1_ref, w2t_ref, b2_ref, oT_ref, *,
                       d_in, d_out):
    # xT_ref : (D_in, TB)   batch on lanes
    # w1_ref : (H, D_in)    PyTorch lin1.weight layout
    # b1_ref : (H, 1)
    # w2t_ref: (H, D_out)   lin2.weight transposed ([in, out])
    # b2_ref : (D_out, 1)
    # oT_ref : (D_out, TB)  lane-dense output tile
    x = xT_ref[...].astype(jnp.float32)            # features.float()
    w1 = w1_ref[...]

    # ---- Layer 1: h[j, b] = tanh(sum_i w1[j, i] * x[i, b] + b1[j]) ----------
    # D_in broadcast FMAs on the VPU (no MXU). Bias added once, outside loops.
    acc = w1[:, 0:1] * x[0:1, :]                   # (H, 1) * (1, TB) -> (H, TB)
    for i in range(1, d_in):
        acc = acc + w1[:, i:i+1] * x[i:i+1, :]
    h = jnp.tanh(acc + b1_ref[...])                # (H, TB), EUP

    # ---- Layer 2: y[k, b] = sigmoid(sum_j w2[k, j] * h[j, b] + b2[k]) -------
    # Dense multiply + sublane (axis 0) reduction per output unit.
    w2t = w2t_ref[...]                             # (H, D_out)
    b2 = b2_ref[...]                               # (D_out, 1)
    cols = []
    for k in range(d_out):
        yk = jnp.sum(h * w2t[:, k:k+1], axis=0, keepdims=True)   # (1, TB)
        cols.append(yk + b2[k:k+1, 0:1])
    y = cols[0] if d_out == 1 else jnp.concatenate(cols, axis=0)  # (D_out, TB)

    oT_ref[...] = jax.nn.sigmoid(y)


def _round_up(a, m):
    return (a + m - 1) // m * m


def legacy_xor_forward_t(xT, w1, b1, w2, b2, *, tb_max=32768):
    """Core entry point on already-transposed features.

    xT: [D_in, B] (any float dtype), w1: [H, D_in], b1: [H],
    w2: [D_out, H] (PyTorch nn.Linear layouts), b2: [D_out].
    Returns [D_out, B] float32.
    """
    d_in, batch = xT.shape
    hidden = w1.shape[0]
    d_out = w2.shape[0]

    # Tile size: multiple of 128 lanes, capped so the double-buffered VMEM
    # footprint stays a few MiB (safe on v5e/v6e/v7x scoped limits).
    tb = min(tb_max, _round_up(batch, 128))
    b_pad = _round_up(batch, tb)
    if b_pad != batch:
        xT = jnp.pad(xT, ((0, 0), (0, b_pad - batch)))

    kernel = functools.partial(_legacy_xor_kernel, d_in=d_in, d_out=d_out)

    outT = pl.pallas_call(
        kernel,
        out_shape=jax.ShapeDtypeStruct((d_out, b_pad), jnp.float32),
        grid=(b_pad // tb,),
        in_specs=[
            pl.BlockSpec((d_in, tb), lambda i: (0, i)),      # x tile (pipelined)
            pl.BlockSpec((hidden, d_in), lambda i: (0, 0)),  # w1 (resident)
            pl.BlockSpec((hidden, 1), lambda i: (0, 0)),     # b1 (resident)
            pl.BlockSpec((hidden, d_out), lambda i: (0, 0)), # w2^T (resident)
            pl.BlockSpec((d_out, 1), lambda i: (0, 0)),      # b2 (resident)
        ],
        out_specs=pl.BlockSpec((d_out, tb), lambda i: (0, i)),  # lane-dense out
        compiler_params=pltpu.CompilerParams(
            dimension_semantics=("parallel",),        # shard batch over v7x TCs
            vmem_limit_bytes=32 * 1024 * 1024,        # headroom over v5e default
        ),
    )(xT, w1, b1.reshape(hidden, 1), jnp.transpose(w2),
      b2.reshape(d_out, 1))
    return outT[:, :batch]


def legacy_xor_forward(features, w1, b1, w2, b2, *, tb_max=32768):
    """PyTorch-interface wrapper. features: [B, D_in]; returns [B, D_out] f32.

    The transpose below is layout plumbing so the kernel is lane-dense; callers
    with very large batches should keep data in [D_in, B] layout and call
    legacy_xor_forward_t directly to skip this extra HBM pass.
    """
    xT = jnp.transpose(features)
    outT = legacy_xor_forward_t(xT, w1, b1, w2, b2, tb_max=tb_max)
    return jnp.transpose(outT)


def init_params(key, input_dim, output_dim, hidden=8):
    """nn.Linear-style U(-1/sqrt(fan_in), 1/sqrt(fan_in)) init, PyTorch layouts."""
    k1, k2, k3, k4 = jax.random.split(key, 4)
    bound1 = 1.0 / (input_dim ** 0.5)
    bound2 = 1.0 / (hidden ** 0.5)
    w1 = jax.random.uniform(k1, (hidden, input_dim), jnp.float32, -bound1, bound1)
    b1 = jax.random.uniform(k2, (hidden,), jnp.float32, -bound1, bound1)
    w2 = jax.random.uniform(k3, (output_dim, hidden), jnp.float32, -bound2, bound2)
    b2 = jax.random.uniform(k4, (output_dim,), jnp.float32, -bound2, bound2)
    return w1, b1, w2, b2


def _reference(features, w1, b1, w2, b2):
    x = features.astype(jnp.float32)
    h = jnp.tanh(x @ w1.T + b1)
    return jax.nn.sigmoid(h @ w2.T + b2)


if __name__ == "__main__":
    key = jax.random.PRNGKey(0)
    kx, kp, kx2 = jax.random.split(key, 3)

    # XOR-style problem: small batch, 2 input features, 1 output.
    batch, input_dim, output_dim = 8, 2, 1
    features = jax.random.bernoulli(kx, 0.5, (batch, input_dim)).astype(jnp.float32)
    w1, b1, w2, b2 = init_params(kp, input_dim, output_dim)

    out = legacy_xor_forward(features, w1, b1, w2, b2)
    out = jax.block_until_ready(out)
    ref = _reference(features, w1, b1, w2, b2)
    assert out.shape == (batch, output_dim)
    assert jnp.allclose(out, ref, atol=1e-5, rtol=1e-5)

    # Second check: non-multiple-of-128 batch with a small tile cap so the
    # multi-tile grid + padding/pipelining path is exercised.
    feats2 = jax.random.normal(kx2, (300, input_dim), jnp.float32)
    out2 = jax.block_until_ready(
        legacy_xor_forward(feats2, w1, b1, w2, b2, tb_max=128))
    ref2 = _reference(feats2, w1, b1, w2, b2)
    assert out2.shape == (300, output_dim)
    assert jnp.allclose(out2, ref2, atol=1e-5, rtol=1e-5)

    print("KERNEL_OK")
</pallas_src>

<mosaic_0001>
module attributes {stable_mosaic.version = 11 : i64} {
  func.func @_legacy_xor_kernel(%arg0: i32, %arg1: memref<2x128xf32, #tpu.memory_space<vmem>>, %arg2: memref<8x2xf32, #tpu.memory_space<vmem>>, %arg3: memref<8x1xf32, #tpu.memory_space<vmem>>, %arg4: memref<8x1xf32, #tpu.memory_space<vmem>>, %arg5: memref<1x1xf32, #tpu.memory_space<vmem>>, %arg6: memref<1x128xf32, #tpu.memory_space<vmem>>) attributes {dimension_semantics = [#tpu.dimension_semantics<parallel>], iteration_bounds = array<i64: 1>, scalar_prefetch = 0 : i64, scratch_operands = 0 : i64, tpu.core_type = #tpu.core_type<tc>, window_params = [{transform_indices = @transform_0, window_bounds = array<i64: 2, 128>}, {pipeline_mode = #tpu.pipeline_mode<synchronous>, transform_indices = @transform_1, window_bounds = array<i64: 8, 2>}, {pipeline_mode = #tpu.pipeline_mode<synchronous>, transform_indices = @transform_2, window_bounds = array<i64: 8, 1>}, {pipeline_mode = #tpu.pipeline_mode<synchronous>, transform_indices = @transform_3, window_bounds = array<i64: 8, 1>}, {pipeline_mode = #tpu.pipeline_mode<synchronous>, transform_indices = @transform_4, window_bounds = array<i64: 1, 1>}, {transform_indices = @transform_5, window_bounds = array<i64: 1, 128>}]} {
    %c0 = arith.constant 0 : index
    %c0_0 = arith.constant 0 : index
    %0 = vector.load %arg1[%c0, %c0_0] : memref<2x128xf32, #tpu.memory_space<vmem>>, vector<2x128xf32>
    %c0_1 = arith.constant 0 : index
    %c0_2 = arith.constant 0 : index
    %1 = vector.load %arg2[%c0_1, %c0_2] : memref<8x2xf32, #tpu.memory_space<vmem>>, vector<8x2xf32>
    %2 = vector.extract_strided_slice %1 {offsets = [0, 0], sizes = [8, 1], strides = [1, 1]} : vector<8x2xf32> to vector<8x1xf32>
    %3 = vector.extract_strided_slice %0 {offsets = [0, 0], sizes = [1, 128], strides = [1, 1]} : vector<2x128xf32> to vector<1x128xf32>
    %4 = vector.broadcast %2 : vector<8x1xf32> to vector<8x128xf32>
    %5 = vector.broadcast %3 : vector<1x128xf32> to vector<8x128xf32>
    %6 = arith.mulf %4, %5 : vector<8x128xf32>
    %7 = vector.extract_strided_slice %1 {offsets = [0, 1], sizes = [8, 1], strides = [1, 1]} : vector<8x2xf32> to vector<8x1xf32>
    %8 = vector.extract_strided_slice %0 {offsets = [1, 0], sizes = [1, 128], strides = [1, 1]} : vector<2x128xf32> to vector<1x128xf32>
    %9 = vector.broadcast %7 : vector<8x1xf32> to vector<8x128xf32>
    %10 = vector.broadcast %8 : vector<1x128xf32> to vector<8x128xf32>
    %11 = arith.mulf %9, %10 : vector<8x128xf32>
    %12 = arith.addf %6, %11 : vector<8x128xf32>
    %c0_3 = arith.constant 0 : index
    %c0_4 = arith.constant 0 : index
    %13 = vector.load %arg3[%c0_3, %c0_4] : memref<8x1xf32, #tpu.memory_space<vmem>>, vector<8x1xf32>
    %14 = vector.broadcast %13 : vector<8x1xf32> to vector<8x128xf32>
    %15 = arith.addf %12, %14 : vector<8x128xf32>
    %16 = math.tanh %15 : vector<8x128xf32>
    %c0_5 = arith.constant 0 : index
    %c0_6 = arith.constant 0 : index
    %17 = vector.load %arg4[%c0_5, %c0_6] : memref<8x1xf32, #tpu.memory_space<vmem>>, vector<8x1xf32>
    %c0_7 = arith.constant 0 : index
    %c0_8 = arith.constant 0 : index
    %18 = vector.load %arg5[%c0_7, %c0_8] : memref<1x1xf32, #tpu.memory_space<vmem>>, vector<1x1xf32>
    %19 = vector.broadcast %17 : vector<8x1xf32> to vector<8x128xf32>
    %20 = arith.mulf %16, %19 : vector<8x128xf32>
    %cst = arith.constant dense<0.000000e+00> : vector<128xf32>
    %21 = vector.multi_reduction <add>, %20, %cst [0] : vector<8x128xf32> to vector<128xf32>
    %22 = vector.shape_cast %21 : vector<128xf32> to vector<1x128xf32>
    %23 = vector.broadcast %18 : vector<1x1xf32> to vector<1x128xf32>
    %24 = arith.addf %22, %23 : vector<1x128xf32>
    %25 = arith.negf %24 : vector<1x128xf32>
    %26 = math.exp %25 : vector<1x128xf32>
    %cst_9 = arith.constant 1.000000e+00 : f32
    %27 = vector.broadcast %cst_9 : f32 to vector<1x128xf32>
    %28 = arith.addf %27, %26 : vector<1x128xf32>
    %29 = arith.divf %27, %28 : vector<1x128xf32>
    %c0_10 = arith.constant 0 : index
    %c0_11 = arith.constant 0 : index
    %30 = vector.load %arg6[%c0_10, %c0_11] : memref<1x128xf32, #tpu.memory_space<vmem>>, vector<1x128xf32>
    tpu.vector_store %arg6[%c0_10, %c0_11], %29 {strides = array<i32>} : memref<1x128xf32, #tpu.memory_space<vmem>>, vector<1x128xf32>,
    return
  }
  func.func @transform_0(%arg0: i32) -> (i32, i32) {
    %c0_i32 = arith.constant 0 : i32
    %c0_i32_0 = arith.constant 0 : i32
    return %c0_i32, %arg0 : i32, i32
  }
  func.func @transform_1(%arg0: i32) -> (i32, i32) {
    %c0_i32 = arith.constant 0 : i32
    %c0_i32_0 = arith.constant 0 : i32
    %c0_i32_1 = arith.constant 0 : i32
    return %c0_i32, %c0_i32_0 : i32, i32
  }
  func.func @transform_2(%arg0: i32) -> (i32, i32) {
    %c0_i32 = arith.constant 0 : i32
    %c0_i32_0 = arith.constant 0 : i32
    %c0_i32_1 = arith.constant 0 : i32
    return %c0_i32, %c0_i32_0 : i32, i32
  }
  func.func @transform_3(%arg0: i32) -> (i32, i32) {
    %c0_i32 = arith.constant 0 : i32
    %c0_i32_0 = arith.constant 0 : i32
    %c0_i32_1 = arith.constant 0 : i32
    return %c0_i32, %c0_i32_0 : i32, i32
  }
  func.func @transform_4(%arg0: i32) -> (i32, i32) {
    %c0_i32 = arith.constant 0 : i32
    %c0_i32_0 = arith.constant 0 : i32
    %c0_i32_1 = arith.constant 0 : i32
    return %c0_i32, %c0_i32_0 : i32, i32
  }
  func.func @transform_5(%arg0: i32) -> (i32, i32) {
    %c0_i32 = arith.constant 0 : i32
    %c0_i32_0 = arith.constant 0 : i32
    return %c0_i32, %arg0 : i32, i32
  }
}

</mosaic_0001>

<llo_original>
// kernel: tpu_custom_call.1
$region0: #{tpu_custom_call.1}
  #allocation0 [shape = 'u32[]', space=smem, size = 0x4, offset = 0x4, fixed_abs, tag = 'smem constant byte address 0x4 - core index']
  #allocation1 [shape = 'u32[144,128]{1,0:T(1,128)}', space=vmem, size = 0x12000, scoped, tag = 'internal scratch']
  #allocation2 [shape = 'f32[1,1]{1,0:T(1,128)S(1)}', space=vmem, size = 0x200, scoped, tag = 'scoped memory for tpu_custom_call.1']
  %s0 = inlined_call_operand.vmem [shape: f32[2,128], index: 0, kind: input, shape index: {}]
  %s1 = inlined_call_operand.vmem [shape: f32[8,2], index: 1, kind: input, shape index: {}]
  %s2 = inlined_call_operand.vmem [shape: f32[8,1], index: 2, kind: input, shape index: {}]
  %s3 = inlined_call_operand.vmem [shape: f32[8,1], index: 3, kind: input, shape index: {}]
  %s4 = inlined_call_operand.<no memory space> [shape: f32[1,1], index: 4, kind: input, shape index: {}]
  %s5 = inlined_call_operand.hbm [shape: f32[1,128], index: 5, kind: output, shape index: {}]
  %s6 = sld [smem:[#allocation0]]
  $region30: #{tpu_custom_call.1} parent=0
    _
  %s8 = ssub.s32 1, %s6
  %s9 = scalar_select 0, %s8, %s6
  %v10 = vstv %s4
  %11 = vst [vmem:[#allocation2] sm:$0x1] %v10
  $region1: #{tpu_custom_call.1} parent=0
    #allocation3 [shape = 'u8[512]{0}', space=vmem, size = 0x400, scoped, tag = 'output window, operand 0, single buffered']
    #allocation4 [shape = 's32[1]{0}', space=sflag, size = 0x4, scoped, tag = 'scoped memory for tpu_custom_call.1']
    %12 = vsyncpa [#allocation4], 0
    // Predicated region
    $region2: #{tpu_custom_call.1} parent=1 // pred_check
      _
    $region3: #{tpu_custom_call.1} parent=1 // pred_check_branch
      %14 = sbr.rel (0) target = $region5
    $region4: #{tpu_custom_call.1} parent=1 // pred_region
      _
    $region5: #{tpu_custom_call.1} parent=1 // pred_fallthru
      _
    // Predicated region
    $region6: #{tpu_custom_call.1} parent=1 // pred_check
      _
    $region7: #{tpu_custom_call.1} parent=1 // pred_check_branch
      %16 = sbr.rel (0) target = $region9
    $region8: #{tpu_custom_call.1} parent=1 // pred_region
      _
    $region9: #{tpu_custom_call.1} parent=1 // pred_fallthru
      _
    // Predicated region
    $region10: #{tpu_custom_call.1} parent=1 // pred_check
      _
    $region11: #{tpu_custom_call.1} parent=1 // pred_check_branch
      %18 = sbr.rel (0) target = $region13
    $region12: #{tpu_custom_call.1} parent=1 // pred_region
      _
    $region13: #{tpu_custom_call.1} parent=1 // pred_fallthru
      _
    // Predicated region
    $region14: #{tpu_custom_call.1} parent=1 // pred_check
      _
    $region15: #{tpu_custom_call.1} parent=1 // pred_check_branch
      %20 = sbr.rel (0) target = $region17
    $region16: #{tpu_custom_call.1} parent=1 // pred_region
      _
    $region17: #{tpu_custom_call.1} parent=1 // pred_fallthru
      _
    // Predicated region
    $region18: #{tpu_custom_call.1} parent=1 // pred_check
      _
    $region19: #{tpu_custom_call.1} parent=1 // pred_check_branch
      %22 = sbr.rel (0) target = $region21
    $region20: #{tpu_custom_call.1} parent=1 // pred_region
      _
    $region21: #{tpu_custom_call.1} parent=1 // pred_fallthru
      _
    %v23 = vld [vmem:[%s0] sm:$0x3]
    %v24 = vld [vmem:[%s1] sm:$0xff]
    %26 = vset.pattern.permute.xlu0 0
    %27 = vperm.xlu0 %26, %v24
    %v28 = vpop.permute.xlu0 %27
    %v30 = vlaneseq
    %v31 = vshrl.u32 %v30, 7
    %v32 = vsub.s32 0, %v31
    %v33 = vrot.slane %v23, %v32
    %v34 = vmul.f32 %v28, %v33
    %35 = vset.pattern.permute.xlu0 1
    %36 = vperm.xlu0 %35, %v24
    %v37 = vpop.permute.xlu0 %36
    %v39 = vlaneseq
    %v40 = vshrl.u32 %v39, 7
    %v41 = vsub.s32 1, %v40
    %v42 = vrot.slane %v23, %v41
    %v43 = vmul.f32 %v37, %v42
    %v44 = vadd.f32 %v34, %v43
    %v45 = vld [vmem:[%s2] sm:$0xff]
    %47 = vset.pattern.permute.xlu0 0
    %48 = vperm.xlu0 %47, %v45
    %v49 = vpop.permute.xlu0 %48
    %v51 = vadd.f32 %v44, %v49
    %v52 = vtanh.pop %v51
    %v53 = vld [vmem:[%s3] sm:$0xff]
    %v54 = vld [vmem:[#allocation2] sm:$0x1]
    %56 = vset.pattern.permute.xlu0 0
    %57 = vperm.xlu0 %56, %v53
    %v58 = vpop.permute.xlu0 %57
    %v60 = vmul.f32 %v52, %v58
    %v61 = vrot.slane %v60, 4
    %v62 = vadd.f32 %v60, %v61
    %v63 = vrot.slane %v62, 2
    %v64 = vadd.f32 %v62, %v63
    %v65 = vrot.slane %v64, 1
    %v66 = vadd.f32 %v64, %v65
    %68 = vset.pattern.permute.xlu0 0
    %69 = vperm.xlu0 %68, %v54
    %v70 = vpop.permute.xlu0 %69
    %v72 = vlaneseq
    %v73 = vshrl.u32 %v72, 7
    %v74 = vsub.s32 0, %v73
    %v75 = vrot.slane %v70, %v74
    %v76 = vadd.f32 %v66, %v75
    %v77 = vxor.u32 %v76, 2147483648
    %v78 = vmul.f32 %v77, 1.442695
    %v79 = vpow.pop %v78
    %v80 = vadd.f32 %v79, 1.0
    %v81 = vrcp.pop %v80
    %v82 = vmul.f32 1.0, %v81
    %83 = vst [vmem:[#allocation3] sm:$0x1] %v82
    // Predicated region
    $region22: #{tpu_custom_call.1} parent=1 // pred_check
      _
    $region23: #{tpu_custom_call.1} parent=1 // pred_check_branch
      %85 = sbr.rel (0) target = $region25
    $region24: #{tpu_custom_call.1} parent=1 // pred_region
      %s87 = ssub.s32 16, 16
      %88 = vsyncadd [#allocation4], %s87
      %s90 = sshll.u32 [#allocation3], 4
      %s91 = int_to_ptr.vmem [resolvable:$true] %s90
      %93 = dma.vmem_to_hbm [thread:$0]  %s91, 16, %s5, [#allocation4]
    $region25: #{tpu_custom_call.1} parent=1 // pred_fallthru
      _
    // Predicated region
    $region26: #{tpu_custom_call.1} parent=1 // pred_check
      _
    $region27: #{tpu_custom_call.1} parent=1 // pred_check_branch
      %95 = sbr.rel (0) target = $region29
    $region28: #{tpu_custom_call.1} parent=1 // pred_region
      %96 = dma.done [#allocation4], 16
    $region29: #{tpu_custom_call.1} parent=1 // pred_fallthru
      _
    %97 = vsyncpa [#allocation4], 1

</llo_original>
